<compile_context>
chip_gen: v5e
topology: v5e:2x2
jax: 0.10.0
libtpu: 0.0.40
codegen_flags: <defaults>
</compile_context>

<pallas_src>
import functools

import jax
import jax.numpy as jnp
from jax.experimental import pallas as pl
from jax.experimental.pallas import tpu as pltpu


def _cross_task_kernel(inv_hw, ftsl_ref, fseg_ref, w1t_ref, b1_ref, w2_ref,
                       b2_ref, o_ref):
    """One batch tile: o = F_seg + F_tsl * sigmoid(W2 relu(W1 mean(F_tsl)+b1)+b2).

    ftsl_ref / fseg_ref / o_ref : (bt, C, HW) in the I/O dtype (f32 or bf16),
    HW lane-dense (full spatial extent of the array, so no wrapper padding).
    w1t : (1, C, Cr) f32 (= W1.T), w2 : (1, C, Cr) f32 (= W2),
    b1  : (1, 1, Cr) f32,          b2 : (1, C, 1) f32.
    """
    # All math in f32 (explicit casts so v5e, which has no bf16 VPU/EUP, is
    # safe); the casts are no-ops for f32 inputs.
    xf = ftsl_ref[...].astype(jnp.float32)                       # (bt, C, HW)

    # Global average pool over the lane (spatial) axis. keepdims keeps C on
    # sublanes, which is exactly the layout the final lane-broadcast needs, so
    # the SE vector never goes through a lane<->sublane relayout.
    mean = jnp.sum(xf, axis=2, keepdims=True) * inv_hw           # (bt, C, 1)

    # Tiny SE MLP (C x Cr = 32 x 4) done with VPU broadcasts + XLU reduces
    # instead of MXU matmuls: avoids MXU push/pop latency on the serial tail
    # of each grid step (the steps here are latency/HBM bound, not FLOP bound).
    h = jnp.sum(mean * w1t_ref[...], axis=1, keepdims=True) + b1_ref[...]  # (bt,1,Cr)
    h = jnp.maximum(h, 0.0)                                       # ReLU
    s = jnp.sum(h * w2_ref[...], axis=2, keepdims=True) + b2_ref[...]      # (bt,C,1)
    s = jax.nn.sigmoid(s)                                         # Sigmoid

    # Fused scale-and-add, channel scale broadcast over the spatial lanes.
    o_ref[...] = (fseg_ref[...].astype(jnp.float32) + xf * s).astype(o_ref.dtype)


def _tpu_memory_model():
    """(vmem_capacity_bytes, multi_tensorcore) for the current TPU generation."""
    vmem = 64 << 20                       # conservative default (v7x per-TC VMEM)
    try:
        info = pltpu.get_tpu_info()
        vmem = int(getattr(info, "vmem_capacity_bytes", vmem))
    except Exception:                     # non-TPU backend / interpret mode
        pass
    # Chips with <=64 MiB VMEM per TensorCore (v7x) have 2 TCs per chip and
    # want >=2 grid steps on the parallel axis; 128 MiB chips (v5e/v6e) have a
    # single TC, so the grid is a purely serial loop there.
    multi_tc = vmem <= (64 << 20)
    return vmem, multi_tc


def _choose_batch_tile(batch, per_sample_bytes, block_budget, multi_tc, max_bt):
    """Largest divisor of `batch` whose resident blocks fit `block_budget`.

    Single-TC chips (v5e/v6e): maximize the tile even if grid == (1,) - extra
    steps only add ~0.35us/step overhead and shrink DMAs with zero parallelism
    gain.  Multi-TC (v7x): keep >=2 steps so megacore sharding gives each core
    one maximal block.
    """
    cap = max(1, block_budget // per_sample_bytes)
    if multi_tc and batch >= 2:
        cap = min(cap, max(1, batch // 2))
    if max_bt is not None:
        cap = min(cap, max_bt)
    bt = 1
    for d in range(1, batch + 1):
        if batch % d == 0 and d <= cap:
            bt = d
    return bt


def cross_task_module(f_seg, f_tsl, w1, b1, w2, b2, *,
                      alias_out_to_seg=False, max_batch_tile=None):
    """CrossTaskmodule forward: F_seg + F_tsl * SE(F_tsl).

    f_seg, f_tsl : (B, C, H, W) float32 or bfloat16 (same dtype; bf16 I/O
                   halves HBM traffic for this bandwidth-bound kernel).
    w1 : (C//r, C), b1 : (C//r,)   -- nn.Linear(C, C//r)
    w2 : (C, C//r), b2 : (C,)      -- nn.Linear(C//r, C)
    returns (B, C, H, W) in the input dtype.
    """
    B, C, H, W = f_tsl.shape
    assert f_seg.shape == f_tsl.shape and f_seg.dtype == f_tsl.dtype
    Cr = w1.shape[0]
    HW = H * W
    dtype = f_tsl.dtype
    itemsize = jnp.dtype(dtype).itemsize

    # No wrapper-side pad / slice: those are extra XLA passes over HBM (>2x
    # total traffic).  The block's last two dims equal the full array dims
    # (C, HW), which satisfies the (8,128) rule; a masked store on the final
    # lane tile is far cheaper than extra full HBM passes.
    x2 = f_tsl.reshape(B, C, HW)
    g2 = f_seg.reshape(B, C, HW)

    vmem_cap, multi_tc = _tpu_memory_model()
    # Scoped-VMEM ceiling: leave >=16 MiB for Mosaic internal scratch, weights
    # and semaphores (~48 MiB on 64 MiB/TC v7x, ~100 MiB on 128 MiB v5e/v6e).
    limit_cap = max(min(vmem_cap - (16 << 20), 100 << 20), 32 << 20)
    block_budget = limit_cap - (6 << 20)

    # Resident bytes per sample per grid step: 2 double-buffered inputs, one
    # double-buffered output, plus ~2 f32 temporaries for the f32 compute path.
    per_sample = C * HW * (6 * itemsize + 8)
    bt = _choose_batch_tile(B, per_sample, block_budget, multi_tc, max_batch_tile)
    num_steps = B // bt
    # TODO(synk): if even bt == 1 exceeds the budget (very large C*H*W), add a
    # two-pass spatially tiled fallback (partial sums, then rescale).

    block_in_bytes = bt * C * HW * itemsize
    # Deep-buffer the two streaming inputs when per-step blocks are small and
    # there are enough steps for the extra lookahead to matter: hides DMA issue
    # latency and the serial reduce->SE->sigmoid tail of each step.
    nbuf_in = 3 if (block_in_bytes < (1 << 20) and num_steps >= 3) else 2
    pipe_mode = pl.Buffered(nbuf_in) if nbuf_in != 2 else None

    weights_bytes = 4 * (2 * C * Cr + Cr + C) + (64 << 10)
    needed = bt * C * HW * (2 * nbuf_in * itemsize + 2 * itemsize + 8) + weights_bytes
    vmem_limit = int(min(limit_cap, max(32 << 20, needed + (6 << 20))))

    # Tiny SE weights kept resident in f32. W1 is pre-transposed so both weight
    # operands are (1, C, Cr) and the kernel needs no in-kernel transposes.
    w1t = jnp.asarray(w1, jnp.float32).T.reshape(1, C, Cr)
    w2f = jnp.asarray(w2, jnp.float32).reshape(1, C, Cr)
    b1r = jnp.asarray(b1, jnp.float32).reshape(1, 1, Cr)
    b2r = jnp.asarray(b2, jnp.float32).reshape(1, C, 1)

    kernel = functools.partial(_cross_task_kernel, float(1.0 / HW))

    def stream_spec():
        return pl.BlockSpec((bt, C, HW), lambda i: (i, 0, 0),
                            pipeline_mode=pipe_mode)

    out = pl.pallas_call(
        kernel,
        out_shape=jax.ShapeDtypeStruct((B, C, HW), dtype),
        grid_spec=pltpu.PrefetchScalarGridSpec(
            num_scalar_prefetch=0,
            grid=(num_steps,),
            in_specs=[
                stream_spec(),                                    # F_tsl
                stream_spec(),                                    # F_seg
                pl.BlockSpec((1, C, Cr), lambda i: (0, 0, 0)),    # W1^T
                pl.BlockSpec((1, 1, Cr), lambda i: (0, 0, 0)),    # b1
                pl.BlockSpec((1, C, Cr), lambda i: (0, 0, 0)),    # W2
                pl.BlockSpec((1, C, 1), lambda i: (0, 0, 0)),     # b2
            ],
            out_specs=pl.BlockSpec((bt, C, HW), lambda i: (i, 0, 0)),
        ),
        compiler_params=pltpu.CompilerParams(
            dimension_semantics=("parallel",),
            vmem_limit_bytes=vmem_limit),
        # Alias the output onto F_seg's buffer (out = F_seg + ...): avoids a
        # separate HBM output allocation.  Only a real win inside jit with the
        # caller donating f_seg; must stay off for the eager reference check.
        input_output_aliases=({1: 0} if alias_out_to_seg else {}),
    )(x2, g2, w1t, b1r, w2f, b2r)

    return out.reshape(B, C, H, W)


def cross_task_ref(f_seg, f_tsl, w1, b1, w2, b2):
    # Pure-JAX reference matching CrossTaskmodule.forward (f32 math).
    f_seg = f_seg.astype(jnp.float32)
    f_tsl = f_tsl.astype(jnp.float32)
    y = jnp.mean(f_tsl, axis=(2, 3))                 # avg_pool2d over full spatial
    y = jnp.maximum(y @ w1.T + b1, 0.0)              # linear1 + ReLU
    y = jax.nn.sigmoid(y @ w2.T + b2)                # linear2 + Sigmoid
    return f_seg + f_tsl * y[:, :, None, None]


if __name__ == "__main__":
    # CrossTaskmodule in the spec: nn.Linear(32, 32//8) / nn.Linear(32//8, 32).
    B, C, H, W = 2, 32, 16, 16
    reduction = 8
    Cr = C // reduction

    key = jax.random.PRNGKey(0)
    k_seg, k_tsl, k_w1, k_b1, k_w2, k_b2 = jax.random.split(key, 6)

    f_seg = jax.random.normal(k_seg, (B, C, H, W), dtype=jnp.float32)
    f_tsl = jax.random.normal(k_tsl, (B, C, H, W), dtype=jnp.float32)
    w1 = jax.random.normal(k_w1, (Cr, C), dtype=jnp.float32) * 0.1
    b1 = jax.random.normal(k_b1, (Cr,), dtype=jnp.float32) * 0.1
    w2 = jax.random.normal(k_w2, (C, Cr), dtype=jnp.float32) * 0.1
    b2 = jax.random.normal(k_b2, (C,), dtype=jnp.float32) * 0.1

    # 1) f32 I/O, lane-dense HW (multiple of 128).
    out = jax.block_until_ready(cross_task_module(f_seg, f_tsl, w1, b1, w2, b2))
    ref = cross_task_ref(f_seg, f_tsl, w1, b1, w2, b2)
    assert out.shape == (B, C, H, W) and out.dtype == jnp.float32
    assert jnp.allclose(out, ref, atol=1e-4, rtol=1e-4), "f32 mismatch vs reference"

    # 2) bf16 I/O (halved HBM traffic for this bandwidth-bound kernel);
    #    f32 math inside the kernel, only the final store rounds to bf16.
    fsb = f_seg.astype(jnp.bfloat16)
    ftb = f_tsl.astype(jnp.bfloat16)
    out_bf = jax.block_until_ready(cross_task_module(fsb, ftb, w1, b1, w2, b2))
    ref_bf = cross_task_ref(fsb, ftb, w1, b1, w2, b2)
    assert out_bf.dtype == jnp.bfloat16
    assert jnp.allclose(out_bf.astype(jnp.float32), ref_bf, atol=5e-2, rtol=5e-2), \
        "bf16 mismatch vs reference"

    # 3) Non-multiple-of-128 spatial size with many small grid steps: exercises
    #    the no-pad masked lane stores and the Buffered(3) deep-pipeline path.
    B2, H2, W2 = 8, 10, 10
    k1, k2 = jax.random.split(jax.random.PRNGKey(1))
    f_seg2 = jax.random.normal(k1, (B2, C, H2, W2), dtype=jnp.float32)
    f_tsl2 = jax.random.normal(k2, (B2, C, H2, W2), dtype=jnp.float32)
    out2 = jax.block_until_ready(
        cross_task_module(f_seg2, f_tsl2, w1, b1, w2, b2, max_batch_tile=1))
    ref2 = cross_task_ref(f_seg2, f_tsl2, w1, b1, w2, b2)
    assert jnp.allclose(out2, ref2, atol=1e-4, rtol=1e-4), "tiled mismatch vs reference"

    print("KERNEL_OK")
</pallas_src>

<mosaic_0001>
module attributes {stable_mosaic.version = 11 : i64} {
  func.func @_cross_task_kernel(%arg0: i32, %arg1: memref<1x32x256xf32, #tpu.memory_space<vmem>>, %arg2: memref<1x32x256xf32, #tpu.memory_space<vmem>>, %arg3: memref<1x32x4xf32, #tpu.memory_space<vmem>>, %arg4: memref<1x1x4xf32, #tpu.memory_space<vmem>>, %arg5: memref<1x32x4xf32, #tpu.memory_space<vmem>>, %arg6: memref<1x32x1xf32, #tpu.memory_space<vmem>>, %arg7: memref<1x32x256xf32, #tpu.memory_space<vmem>>) attributes {dimension_semantics = [#tpu.dimension_semantics<parallel>], iteration_bounds = array<i64: 2>, scalar_prefetch = 0 : i64, scratch_operands = 0 : i64, tpu.core_type = #tpu.core_type<tc>, window_params = [{transform_indices = @transform_0, window_bounds = array<i64: 1, 32, 256>}, {transform_indices = @transform_1, window_bounds = array<i64: 1, 32, 256>}, {pipeline_mode = #tpu.pipeline_mode<synchronous>, transform_indices = @transform_2, window_bounds = array<i64: 1, 32, 4>}, {pipeline_mode = #tpu.pipeline_mode<synchronous>, transform_indices = @transform_3, window_bounds = array<i64: 1, 1, 4>}, {pipeline_mode = #tpu.pipeline_mode<synchronous>, transform_indices = @transform_4, window_bounds = array<i64: 1, 32, 4>}, {pipeline_mode = #tpu.pipeline_mode<synchronous>, transform_indices = @transform_5, window_bounds = array<i64: 1, 32, 1>}, {transform_indices = @transform_6, window_bounds = array<i64: 1, 32, 256>}]} {
    %c0 = arith.constant 0 : index
    %c0_0 = arith.constant 0 : index
    %c0_1 = arith.constant 0 : index
    %0 = vector.load %arg1[%c0, %c0_0, %c0_1] : memref<1x32x256xf32, #tpu.memory_space<vmem>>, vector<1x32x256xf32>
    %cst = arith.constant dense<0.000000e+00> : vector<1x32xf32>
    %1 = vector.multi_reduction <add>, %0, %cst [2] : vector<1x32x256xf32> to vector<1x32xf32>
    %2 = vector.shape_cast %1 : vector<1x32xf32> to vector<1x32x1xf32>
    %cst_2 = arith.constant 3.906250e-03 : f32
    %3 = vector.broadcast %cst_2 : f32 to vector<1x32x1xf32>
    %4 = arith.mulf %2, %3 : vector<1x32x1xf32>
    %c0_3 = arith.constant 0 : index
    %c0_4 = arith.constant 0 : index
    %c0_5 = arith.constant 0 : index
    %5 = vector.load %arg3[%c0_3, %c0_4, %c0_5] : memref<1x32x4xf32, #tpu.memory_space<vmem>>, vector<1x32x4xf32>
    %6 = vector.broadcast %4 : vector<1x32x1xf32> to vector<1x32x4xf32>
    %7 = arith.mulf %6, %5 : vector<1x32x4xf32>
    %cst_6 = arith.constant dense<0.000000e+00> : vector<1x4xf32>
    %8 = vector.multi_reduction <add>, %7, %cst_6 [1] : vector<1x32x4xf32> to vector<1x4xf32>
    %9 = vector.shape_cast %8 : vector<1x4xf32> to vector<1x1x4xf32>
    %c0_7 = arith.constant 0 : index
    %c0_8 = arith.constant 0 : index
    %c0_9 = arith.constant 0 : index
    %10 = vector.load %arg4[%c0_7, %c0_8, %c0_9] : memref<1x1x4xf32, #tpu.memory_space<vmem>>, vector<1x1x4xf32>
    %11 = arith.addf %9, %10 : vector<1x1x4xf32>
    %cst_10 = arith.constant 0.000000e+00 : f32
    %12 = vector.broadcast %cst_10 : f32 to vector<1x1x4xf32>
    %13 = arith.maximumf %11, %12 : vector<1x1x4xf32>
    %c0_11 = arith.constant 0 : index
    %c0_12 = arith.constant 0 : index
    %c0_13 = arith.constant 0 : index
    %14 = vector.load %arg5[%c0_11, %c0_12, %c0_13] : memref<1x32x4xf32, #tpu.memory_space<vmem>>, vector<1x32x4xf32>
    %15 = vector.broadcast %13 : vector<1x1x4xf32> to vector<1x32x4xf32>
    %16 = arith.mulf %15, %14 : vector<1x32x4xf32>
    %cst_14 = arith.constant dense<0.000000e+00> : vector<1x32xf32>
    %17 = vector.multi_reduction <add>, %16, %cst_14 [2] : vector<1x32x4xf32> to vector<1x32xf32>
    %18 = vector.shape_cast %17 : vector<1x32xf32> to vector<1x32x1xf32>
    %c0_15 = arith.constant 0 : index
    %c0_16 = arith.constant 0 : index
    %c0_17 = arith.constant 0 : index
    %19 = vector.load %arg6[%c0_15, %c0_16, %c0_17] : memref<1x32x1xf32, #tpu.memory_space<vmem>>, vector<1x32x1xf32>
    %20 = arith.addf %18, %19 : vector<1x32x1xf32>
    %21 = arith.negf %20 : vector<1x32x1xf32>
    %22 = math.exp %21 : vector<1x32x1xf32>
    %cst_18 = arith.constant 1.000000e+00 : f32
    %23 = vector.broadcast %cst_18 : f32 to vector<1x32x1xf32>
    %24 = arith.addf %23, %22 : vector<1x32x1xf32>
    %25 = arith.divf %23, %24 : vector<1x32x1xf32>
    %c0_19 = arith.constant 0 : index
    %c0_20 = arith.constant 0 : index
    %c0_21 = arith.constant 0 : index
    %26 = vector.load %arg2[%c0_19, %c0_20, %c0_21] : memref<1x32x256xf32, #tpu.memory_space<vmem>>, vector<1x32x256xf32>
    %27 = vector.broadcast %25 : vector<1x32x1xf32> to vector<1x32x256xf32>
    %28 = arith.mulf %0, %27 : vector<1x32x256xf32>
    %29 = arith.addf %26, %28 : vector<1x32x256xf32>
    %c0_22 = arith.constant 0 : index
    %c0_23 = arith.constant 0 : index
    %c0_24 = arith.constant 0 : index
    %30 = vector.load %arg7[%c0_22, %c0_23, %c0_24] : memref<1x32x256xf32, #tpu.memory_space<vmem>>, vector<1x32x256xf32>
    tpu.vector_store %arg7[%c0_22, %c0_23, %c0_24], %29 {strides = array<i32>} : memref<1x32x256xf32, #tpu.memory_space<vmem>>, vector<1x32x256xf32>,
    return
  }
  func.func @transform_0(%arg0: i32) -> (i32, i32, i32) {
    %c0_i32 = arith.constant 0 : i32
    %c0_i32_0 = arith.constant 0 : i32
    %c0_i32_1 = arith.constant 0 : i32
    return %arg0, %c0_i32, %c0_i32_0 : i32, i32, i32
  }
  func.func @transform_1(%arg0: i32) -> (i32, i32, i32) {
    %c0_i32 = arith.constant 0 : i32
    %c0_i32_0 = arith.constant 0 : i32
    %c0_i32_1 = arith.constant 0 : i32
    return %arg0, %c0_i32, %c0_i32_0 : i32, i32, i32
  }
  func.func @transform_2(%arg0: i32) -> (i32, i32, i32) {
    %c0_i32 = arith.constant 0 : i32
    %c0_i32_0 = arith.constant 0 : i32
    %c0_i32_1 = arith.constant 0 : i32
    %c0_i32_2 = arith.constant 0 : i32
    return %c0_i32, %c0_i32_0, %c0_i32_1 : i32, i32, i32
  }
  func.func @transform_3(%arg0: i32) -> (i32, i32, i32) {
    %c0_i32 = arith.constant 0 : i32
    %c0_i32_0 = arith.constant 0 : i32
    %c0_i32_1 = arith.constant 0 : i32
    %c0_i32_2 = arith.constant 0 : i32
    return %c0_i32, %c0_i32_0, %c0_i32_1 : i32, i32, i32
  }
  func.func @transform_4(%arg0: i32) -> (i32, i32, i32) {
    %c0_i32 = arith.constant 0 : i32
    %c0_i32_0 = arith.constant 0 : i32
    %c0_i32_1 = arith.constant 0 : i32
    %c0_i32_2 = arith.constant 0 : i32
    return %c0_i32, %c0_i32_0, %c0_i32_1 : i32, i32, i32
  }
  func.func @transform_5(%arg0: i32) -> (i32, i32, i32) {
    %c0_i32 = arith.constant 0 : i32
    %c0_i32_0 = arith.constant 0 : i32
    %c0_i32_1 = arith.constant 0 : i32
    %c0_i32_2 = arith.constant 0 : i32
    return %c0_i32, %c0_i32_0, %c0_i32_1 : i32, i32, i32
  }
  func.func @transform_6(%arg0: i32) -> (i32, i32, i32) {
    %c0_i32 = arith.constant 0 : i32
    %c0_i32_0 = arith.constant 0 : i32
    %c0_i32_1 = arith.constant 0 : i32
    return %arg0, %c0_i32, %c0_i32_0 : i32, i32, i32
  }
}

</mosaic_0001>

<llo_original>
// kernel: tpu_custom_call.1
$region0: #{tpu_custom_call.1}
  #allocation0 [shape = 'u32[]', space=smem, size = 0x4, offset = 0x4, fixed_abs, tag = 'smem constant byte address 0x4 - core index']
  #allocation1 [shape = 'u32[72,128]{1,0:T(1,128)}', space=vmem, size = 0x9000, scoped, tag = 'internal scratch']
  %s0 = inlined_call_operand.hbm [shape: f32[2,32,256], index: 0, kind: input, shape index: {}]
  %s1 = inlined_call_operand.hbm [shape: f32[2,32,256], index: 1, kind: input, shape index: {}]
  %s2 = inlined_call_operand.vmem [shape: f32[1,32,4], index: 2, kind: input, shape index: {}]
  %s3 = inlined_call_operand.vmem [shape: f32[1,1,4], index: 3, kind: input, shape index: {}]
  %s4 = inlined_call_operand.vmem [shape: f32[1,32,4], index: 4, kind: input, shape index: {}]
  %s5 = inlined_call_operand.vmem [shape: f32[1,32,1], index: 5, kind: input, shape index: {}]
  %s6 = inlined_call_operand.hbm [shape: f32[2,32,256], index: 6, kind: output, shape index: {}]
  %s7 = sld [smem:[#allocation0]]
  $region65: #{tpu_custom_call.1} parent=0
    _
  %s9 = ssub.s32 1, %s7
  %s10 = scalar_select 0, %s9, %s7
  $region1: #{tpu_custom_call.1} parent=0
    #allocation2 [shape = 'u8[65536]{0}', space=vmem, size = 0x10000, scoped, tag = 'input window, operand 0']
    #allocation3 [shape = 's32[2]{0}', space=sflag, size = 0x8, scoped, tag = 'scoped memory for tpu_custom_call.1']
    #allocation4 [shape = 's32[2]{0}', space=sflag, size = 0x8, scoped, tag = 'scoped memory for tpu_custom_call.1']
    #allocation5 [shape = 'u8[65536]{0}', space=vmem, size = 0x10000, scoped, tag = 'input window, operand 1']
    #allocation6 [shape = 's32[2]{0}', space=sflag, size = 0x8, scoped, tag = 'scoped memory for tpu_custom_call.1']
    #allocation7 [shape = 'u8[65536]{0}', space=vmem, size = 0x10000, scoped, tag = 'output window, operand 0']
    %11 = vsyncpa [#allocation3], 0
    %s12 = scalar_lea.sflag [#allocation3], 1
    %13 = vsyncpa %s12, 0
    %14 = vsyncpa [#allocation6], 0
    %s15 = scalar_lea.sflag [#allocation6], 1
    %16 = vsyncpa %s15, 0
    %17 = vsyncpa [#allocation4], 0
    %s18 = scalar_lea.sflag [#allocation4], 1
    %19 = vsyncpa %s18, 0
    loop: start=0, step=1, limit=4
    $region2: #{tpu_custom_call.1} parent=1 // loop_pre_header
      _
    $region3: #{tpu_custom_call.1} parent=1 // loop_header
      %s21 = sphi 0, %s25
      %p22 = scmp.ge.s32.totalorder %s21, 4
      %s31 = sphi 0, %s33
      %s34 = sphi 0, %s31
      %s35 = sphi 0, %s34
      %s51 = sphi 0, %s35
      %s57 = sphi 0, %s59
      %s60 = sphi 0, %s57
      %s61 = sphi 0, %s60
      %s77 = sphi 0, %s61
      %s81 = sphi 0, %s81
      %s83 = sphi 0, %s81
      %s84 = sphi 0, %s83
      %s98 = sphi 0, %s84
      %s102 = sphi 0, %s102
      %s104 = sphi 0, %s102
      %s105 = sphi 0, %s104
      %s119 = sphi 0, %s105
      %s123 = sphi 0, %s123
      %s125 = sphi 0, %s123
      %s126 = sphi 0, %s125
      %s140 = sphi 0, %s126
      %s144 = sphi 0, %s144
      %s146 = sphi 0, %s144
      %s147 = sphi 0, %s146
      %s161 = sphi 0, %s147
      %s167 = sphi 0, %s169
      %s170 = sphi 0, %s167
      %s171 = sphi 0, %s170
      %s187 = sphi 0, %s171
    $region4: #{tpu_custom_call.1} parent=1 // loop_header_branch
      %24 = sbr.rel (%p22) target = $region8
    $region5: #{tpu_custom_call.1} parent=1 // loop_body
      %s26 = ssub.s32 %s21, 1
      %s27 = ssub.s32 %s21, 2
      %s28 = sadd.s32 %s21, 1
      %s29 = ssub.s32 %s21, %s28
      %p30 = scmp.eq.s32.totalorder %s29, 0
      %s32 = sadd.s32 %s31, 1
      %s33 = scalar_select %p30, %s31, %s32
      %p36 = pneg %p30
      %p37 = scmp.eq.s32.totalorder %s21, 1
      %p38 = por %p36, %p37
      %p39 = scmp.ne.s32.totalorder %s31, %s34
      %p40 = scmp.eq.s32.totalorder %s21, 0
      %p41 = por %p39, %p40
      %p42 = scmp.ne.s32.totalorder %s31, %s34
      %p43 = scmp.eq.s32.totalorder %s26, 1
      %p44 = por %p42, %p43
      %p45 = scmp.ne.s32.totalorder %s34, %s35
      %p46 = scmp.eq.s32.totalorder %s26, 0
      %p47 = por %p45, %p46
      %p48 = scmp.ne.s32.totalorder %s34, %s35
      %p49 = scmp.eq.s32.totalorder %s27, 1
      %p50 = por %p48, %p49
      %p52 = scmp.ne.s32.totalorder %s35, %s51
      %p53 = scmp.eq.s32.totalorder %s27, 0
      %p54 = por %p52, %p53
      %s55 = ssub.s32 %s21, %s28
      %p56 = scmp.eq.s32.totalorder %s55, 0
      %s58 = sadd.s32 %s57, 1
      %s59 = scalar_select %p56, %s57, %s58
      %p62 = pneg %p56
      %p63 = scmp.eq.s32.totalorder %s21, 1
      %p64 = por %p62, %p63
      %p65 = scmp.ne.s32.totalorder %s57, %s60
      %p66 = scmp.eq.s32.totalorder %s21, 0
      %p67 = por %p65, %p66
      %p68 = scmp.ne.s32.totalorder %s57, %s60
      %p69 = scmp.eq.s32.totalorder %s26, 1
      %p70 = por %p68, %p69
      %p71 = scmp.ne.s32.totalorder %s60, %s61
      %p72 = scmp.eq.s32.totalorder %s26, 0
      %p73 = por %p71, %p72
      %p74 = scmp.ne.s32.totalorder %s60, %s61
      %p75 = scmp.eq.s32.totalorder %s27, 1
      %p76 = por %p74, %p75
      %p78 = scmp.ne.s32.totalorder %s61, %s77
      %p79 = scmp.eq.s32.totalorder %s27, 0
      %p80 = por %p78, %p79
      %s82 = sadd.s32 %s81, 1
      %p85 = scmp.eq.s32.totalorder %s21, 1
      %p86 = scmp.ne.s32.totalorder %s81, %s83
      %p87 = scmp.eq.s32.totalorder %s21, 0
      %p88 = por %p86, %p87
      %p89 = scmp.ne.s32.totalorder %s81, %s83
      %p90 = scmp.eq.s32.totalorder %s26, 1
      %p91 = por %p89, %p90
      %p92 = scmp.ne.s32.totalorder %s83, %s84
      %p93 = scmp.eq.s32.totalorder %s26, 0
      %p94 = por %p92, %p93
      %p95 = scmp.ne.s32.totalorder %s83, %s84
      %p96 = scmp.eq.s32.totalorder %s27, 1
      %p97 = por %p95, %p96
      %p99 = scmp.ne.s32.totalorder %s84, %s98
      %p100 = scmp.eq.s32.totalorder %s27, 0
      %p101 = por %p99, %p100
      %s103 = sadd.s32 %s102, 1
      %p106 = scmp.eq.s32.totalorder %s21, 1
      %p107 = scmp.ne.s32.totalorder %s102, %s104
      %p108 = scmp.eq.s32.totalorder %s21, 0
      %p109 = por %p107, %p108
      %p110 = scmp.ne.s32.totalorder %s102, %s104
      %p111 = scmp.eq.s32.totalorder %s26, 1
      %p112 = por %p110, %p111
      %p113 = scmp.ne.s32.totalorder %s104, %s105
      %p114 = scmp.eq.s32.totalorder %s26, 0
      %p115 = por %p113, %p114
      %p116 = scmp.ne.s32.totalorder %s104, %s105
      %p117 = scmp.eq.s32.totalorder %s27, 1
      %p118 = por %p116, %p117
      %p120 = scmp.ne.s32.totalorder %s105, %s119
      %p121 = scmp.eq.s32.totalorder %s27, 0
      %p122 = por %p120, %p121
      %s124 = sadd.s32 %s123, 1
      %p127 = scmp.eq.s32.totalorder %s21, 1
      %p128 = scmp.ne.s32.totalorder %s123, %s125
      %p129 = scmp.eq.s32.totalorder %s21, 0
      %p130 = por %p128, %p129
      %p131 = scmp.ne.s32.totalorder %s123, %s125
      %p132 = scmp.eq.s32.totalorder %s26, 1
      %p133 = por %p131, %p132
      %p134 = scmp.ne.s32.totalorder %s125, %s126
      %p135 = scmp.eq.s32.totalorder %s26, 0
      %p136 = por %p134, %p135
      %p137 = scmp.ne.s32.totalorder %s125, %s126
      %p138 = scmp.eq.s32.totalorder %s27, 1
      %p139 = por %p137, %p138
      %p141 = scmp.ne.s32.totalorder %s126, %s140
      %p142 = scmp.eq.s32.totalorder %s27, 0
      %p143 = por %p141, %p142
      %s145 = sadd.s32 %s144, 1
      %p148 = scmp.eq.s32.totalorder %s21, 1
      %p149 = scmp.ne.s32.totalorder %s144, %s146
      %p150 = scmp.eq.s32.totalorder %s21, 0
      %p151 = por %p149, %p150
      %p152 = scmp.ne.s32.totalorder %s144, %s146
      %p153 = scmp.eq.s32.totalorder %s26, 1
      %p154 = por %p152, %p153
      %p155 = scmp.ne.s32.totalorder %s146, %s147
      %p156 = scmp.eq.s32.totalorder %s26, 0
      %p157 = por %p155, %p156
      %p158 = scmp.ne.s32.totalorder %s146, %s147
      %p159 = scmp.eq.s32.totalorder %s27, 1
      %p160 = por %p158, %p159
      %p162 = scmp.ne.s32.totalorder %s147, %s161
      %p163 = scmp.eq.s32.totalorder %s27, 0
      %p164 = por %p162, %p163
      %s165 = ssub.s32 %s21, %s28
      %p166 = scmp.eq.s32.totalorder %s165, 0
      %s168 = sadd.s32 %s167, 1
      %s169 = scalar_select %p166, %s167, %s168
      %p172 = pneg %p166
      %p173 = scmp.eq.s32.totalorder %s21, 1
      %p174 = por %p172, %p173
      %p175 = scmp.ne.s32.totalorder %s167, %s170
      %p176 = scmp.eq.s32.totalorder %s21, 0
      %p177 = por %p175, %p176
      %p178 = scmp.ne.s32.totalorder %s167, %s170
      %p179 = scmp.eq.s32.totalorder %s26, 1
      %p180 = por %p178, %p179
      %p181 = scmp.ne.s32.totalorder %s170, %s171
      %p182 = scmp.eq.s32.totalorder %s26, 0
      %p183 = por %p181, %p182
      %p184 = scmp.ne.s32.totalorder %s170, %s171
      %p185 = scmp.eq.s32.totalorder %s27, 1
      %p186 = por %p184, %p185
      %p188 = scmp.ne.s32.totalorder %s171, %s187
      %p189 = scmp.eq.s32.totalorder %s27, 0
      %p190 = por %p188, %p189
      %p191 = scmp.le.s32.totalorder 1, %s21
      %p192 = scmp.lt.s32.totalorder %s21, 3
      %p193 = pnand %p191, %p192
      %p194 = pneg %p193
      // Predicated region
      $region9: #{tpu_custom_call.1} parent=5 // pred_check
        _
      $region10: #{tpu_custom_call.1} parent=5 // pred_check_branch
        %196 = sbr.rel (%p193) target = $region12
      $region11: #{tpu_custom_call.1} parent=5 // pred_region
        %s197 = ssub.s32 %s21, 1
        // Predicated region
        $region13: #{tpu_custom_call.1} parent=11 // pred_check
          %p198 = pneg %p94
        $region14: #{tpu_custom_call.1} parent=11 // pred_check_branch
          %200 = sbr.rel (%p198) target = $region16
        $region15: #{tpu_custom_call.1} parent=11 // pred_region
          _
        $region16: #{tpu_custom_call.1} parent=11 // pred_fallthru
          _
        // Predicated region
        $region17: #{tpu_custom_call.1} parent=11 // pred_check
          %p201 = pneg %p115
        $region18: #{tpu_custom_call.1} parent=11 // pred_check_branch
          %203 = sbr.rel (%p201) target = $region20
        $region19: #{tpu_custom_call.1} parent=11 // pred_region
          _
        $region20: #{tpu_custom_call.1} parent=11 // pred_fallthru
          _
        // Predicated region
        $region21: #{tpu_custom_call.1} parent=11 // pred_check
          %p204 = pneg %p136
        $region22: #{tpu_custom_call.1} parent=11 // pred_check_branch
          %206 = sbr.rel (%p204) target = $region24
        $region23: #{tpu_custom_call.1} parent=11 // pred_region
          _
        $region24: #{tpu_custom_call.1} parent=11 // pred_fallthru
          _
        // Predicated region
        $region25: #{tpu_custom_call.1} parent=11 // pred_check
          %p207 = pneg %p157
        $region26: #{tpu_custom_call.1} parent=11 // pred_check_branch
          %209 = sbr.rel (%p207) target = $region28
        $region27: #{tpu_custom_call.1} parent=11 // pred_region
          _
        $region28: #{tpu_custom_call.1} parent=11 // pred_fallthru
          _
      $region12: #{tpu_custom_call.1} parent=5 // pred_fallthru
        _
      %p210 = scmp.lt.s32.totalorder %s21, 2
      // Predicated region
      $region29: #{tpu_custom_call.1} parent=5 // pred_check
        %p211 = pneg %p210
      $region30: #{tpu_custom_call.1} parent=5 // pred_check_branch
        %213 = sbr.rel (%p211) target = $region32
      $region31: #{tpu_custom_call.1} parent=5 // pred_region
        // Predicated region
        $region33: #{tpu_custom_call.1} parent=31 // pred_check
          %p214 = pneg %p41
        $region34: #{tpu_custom_call.1} parent=31 // pred_check_branch
          %216 = sbr.rel (%p214) target = $region36
        $region35: #{tpu_custom_call.1} parent=31 // pred_region
          %s217 = sand.u32 %s31, 1
          %s218 = scalar_lea.sflag [#allocation3], %s217
          %s219 = sand.u32 %s31, 1
          %s220 = smul.addr %s219, 64
          %s221 = scalar_lea.vmem [#allocation2], %s220
          %223 = vsyncadd %s218, 0
          %s224 = smul.addr %s21, 8
          %s225 = smul.addr %s224, 8
          %s226 = scalar_lea.hbm %s0, %s225
          %s227 = sshll.u32 %s226, 4
          %s228 = int_to_ptr.hbm [resolvable:$true] %s227
          %s229 = sshll.u32 %s221, 4
          %s230 = int_to_ptr.vmem [resolvable:$true] %s229
          %235 = dma.hbm_to_vmem [thread:$0]  %s228, 1024, %s230, %s218, 256, 256, 16
        $region36: #{tpu_custom_call.1} parent=31 // pred_fallthru
          _
        // Predicated region
        $region37: #{tpu_custom_call.1} parent=31 // pred_check
          %p236 = pneg %p67
        $region38: #{tpu_custom_call.1} parent=31 // pred_check_branch
          %238 = sbr.rel (%p236) target = $region40
        $region39: #{tpu_custom_call.1} parent=31 // pred_region
          %s239 = sand.u32 %s57, 1
          %s240 = scalar_lea.sflag [#allocation6], %s239
          %s241 = sand.u32 %s57, 1
          %s242 = smul.addr %s241, 64
          %s243 = scalar_lea.vmem [#allocation5], %s242
          %245 = vsyncadd %s240, 0
          %s246 = smul.addr %s21, 8
          %s247 = smul.addr %s246, 8
          %s248 = scalar_lea.hbm %s1, %s247
          %s249 = sshll.u32 %s248, 4
          %s250 = int_to_ptr.hbm [resolvable:$true] %s249
          %s251 = sshll.u32 %s243, 4
          %s252 = int_to_ptr.vmem [resolvable:$true] %s251
          %257 = dma.hbm_to_vmem [thread:$0]  %s250, 1024, %s252, %s240, 256, 256, 16
        $region40: #{tpu_custom_call.1} parent=31 // pred_fallthru
          _
      $region32: #{tpu_custom_call.1} parent=5 // pred_fallthru
        _
      %p258 = scmp.le.s32.totalorder 1, %s21
      %p259 = scmp.lt.s32.totalorder %s21, 3
      %p260 = pnand %p258, %p259
      %p261 = pneg %p260
      // Predicated region
      $region41: #{tpu_custom_call.1} parent=5 // pred_check
        _
      $region42: #{tpu_custom_call.1} parent=5 // pred_check_branch
        %263 = sbr.rel (%p260) target = $region44
      $region43: #{tpu_custom_call.1} parent=5 // pred_region
        %s264 = ssub.s32 %s21, 1
        %s265 = sand.u32 %s34, 1
        %s266 = scalar_lea.sflag [#allocation3], %s265
        %s267 = sand.u32 %s34, 1
        %s268 = smul.addr %s267, 64
        %s269 = scalar_lea.vmem [#allocation2], %s268
        // Predicated region
        $region45: #{tpu_custom_call.1} parent=43 // pred_check
          %p270 = pneg %p47
        $region46: #{tpu_custom_call.1} parent=43 // pred_check_branch
          %272 = sbr.rel (%p270) target = $region48
        $region47: #{tpu_custom_call.1} parent=43 // pred_region
          %274 = dma.done %s266, 1024
        $region48: #{tpu_custom_call.1} parent=43 // pred_fallthru
          _
        %s275 = sand.u32 %s60, 1
        %s276 = scalar_lea.sflag [#allocation6], %s275
        %s277 = sand.u32 %s60, 1
        %s278 = smul.addr %s277, 64
        %s279 = scalar_lea.vmem [#allocation5], %s278
        // Predicated region
        $region49: #{tpu_custom_call.1} parent=43 // pred_check
          %p280 = pneg %p73
        $region50: #{tpu_custom_call.1} parent=43 // pred_check_branch
          %282 = sbr.rel (%p280) target = $region52
        $region51: #{tpu_custom_call.1} parent=43 // pred_region
          %284 = dma.done %s276, 1024
        $region52: #{tpu_custom_call.1} parent=43 // pred_fallthru
          _
        %s285 = sand.u32 %s34, 1
        %s286 = scalar_lea.sflag [#allocation3], %s285
        %s287 = sand.u32 %s34, 1
        %s288 = smul.addr %s287, 64
        %s289 = scalar_lea.vmem [#allocation2], %s288
        %p290 = pneg %p47
        %p291 = pneg %p44
        %s292 = sand.u32 %s60, 1
        %s293 = scalar_lea.sflag [#allocation6], %s292
        %s294 = sand.u32 %s60, 1
        %s295 = smul.addr %s294, 64
        %s296 = scalar_lea.vmem [#allocation5], %s295
        %p297 = pneg %p73
        %p298 = pneg %p70
        %p299 = pneg %p94
        %p300 = pneg %p91
        %p301 = pneg %p115
        %p302 = pneg %p112
        %p303 = pneg %p136
        %p304 = pneg %p133
        %p305 = pneg %p157
        %p306 = pneg %p154
        %p307 = pneg %p183
        %p308 = pneg %p180
        %s309 = sand.u32 %s170, 1
        %s310 = scalar_lea.sflag [#allocation4], %s309
        %s311 = sand.u32 %s170, 1
        %s312 = smul.addr %s311, 64
        %s313 = scalar_lea.vmem [#allocation7], %s312
        %v314 = vld [vmem:[%s269] sm:$0xff]
        %v315 = vld [vmem:[%s269 + $0x8] sm:$0xff]
        %v316 = vld [vmem:[%s269 + $0x10] sm:$0xff]
        %v317 = vld [vmem:[%s269 + $0x18] sm:$0xff]
        %v318 = vld [vmem:[%s269 + $0x20] sm:$0xff]
        %v319 = vld [vmem:[%s269 + $0x28] sm:$0xff]
        %v320 = vld [vmem:[%s269 + $0x30] sm:$0xff]
        %v321 = vld [vmem:[%s269 + $0x38] sm:$0xff]
        %v322 = vadd.f32 %v314, %v315
        %323 = vadd.xlane.f32.xlu0 %v322
        %v324 = vpop.xlane.xlu0 %323
        %v325 = vadd.f32 %v316, %v317
        %326 = vadd.xlane.f32.xlu0 %v325
        %v327 = vpop.xlane.xlu0 %326
        %v328 = vadd.f32 %v318, %v319
        %329 = vadd.xlane.f32.xlu0 %v328
        %v330 = vpop.xlane.xlu0 %329
        %v331 = vadd.f32 %v320, %v321
        %332 = vadd.xlane.f32.xlu0 %v331
        %v333 = vpop.xlane.xlu0 %332
        %v334 = vmul.f32 %v324, 0.00390625
        %v335 = vmul.f32 %v327, 0.00390625
        %v336 = vmul.f32 %v330, 0.00390625
        %v337 = vmul.f32 %v333, 0.00390625
        %v338 = vld [vmem:[%s2] sm:$0xff]
        %v339 = vld [vmem:[%s2 + $0x8] sm:$0xff]
        %v340 = vld [vmem:[%s2 + $0x10] sm:$0xff]
        %v341 = vld [vmem:[%s2 + $0x18] sm:$0xff]
        %v342 = vmul.f32 %v334, %v338
        %v343 = vmul.f32 %v335, %v339
        %v344 = vmul.f32 %v336, %v340
        %v345 = vmul.f32 %v337, %v341
        %vm346 = vcmask 31744
        %v347 = vsel %vm346, %v342, 0.0
        %v348 = vsel %vm346, %v343, 0.0
        %v349 = vadd.f32 %v347, %v348
        %v350 = vsel %vm346, %v344, 0.0
        %v351 = vadd.f32 %v349, %v350
        %v352 = vsel %vm346, %v345, 0.0
        %v353 = vadd.f32 %v351, %v352
        %v354 = vrot.slane %v353, 4
        %v355 = vadd.f32 %v353, %v354
        %v356 = vrot.slane %v355, 2
        %v357 = vadd.f32 %v355, %v356
        %v358 = vrot.slane %v357, 1
        %v359 = vadd.f32 %v357, %v358
        %v360 = vld [vmem:[%s3] sm:$0x1]
        %v361 = vadd.f32 %v359, %v360
        %v362 = vmax.f32 %v361, 0.0
        %v363 = vld [vmem:[%s4] sm:$0xff]
        %v364 = vld [vmem:[%s4 + $0x8] sm:$0xff]
        %v365 = vld [vmem:[%s4 + $0x10] sm:$0xff]
        %v366 = vld [vmem:[%s4 + $0x18] sm:$0xff]
        %v367 = vperm.slane %v362, 0
        %v368 = vmul.f32 %v367, %v363
        %v369 = vmul.f32 %v367, %v364
        %v370 = vmul.f32 %v367, %v365
        %v371 = vmul.f32 %v367, %v366
        %v372 = vsel %vm346, %v368, 0.0
        %373 = vadd.xlane.f32.xlu0 %v372
        %v374 = vpop.xlane.xlu0 %373
        %v375 = vsel %vm346, %v369, 0.0
        %376 = vadd.xlane.f32.xlu0 %v375
        %v377 = vpop.xlane.xlu0 %376
        %v378 = vsel %vm346, %v370, 0.0
        %379 = vadd.xlane.f32.xlu0 %v378
        %v380 = vpop.xlane.xlu0 %379
        %v381 = vsel %vm346, %v371, 0.0
        %382 = vadd.xlane.f32.xlu0 %v381
        %v383 = vpop.xlane.xlu0 %382
        %v384 = vld [vmem:[%s5] sm:$0xff]
        %v385 = vld [vmem:[%s5 + $0x8] sm:$0xff]
        %v386 = vld [vmem:[%s5 + $0x10] sm:$0xff]
        %v387 = vld [vmem:[%s5 + $0x18] sm:$0xff]
        %v388 = vadd.f32 %v374, %v384
        %v389 = vadd.f32 %v377, %v385
        %v390 = vadd.f32 %v380, %v386
        %v391 = vadd.f32 %v383, %v387
        %v392 = vxor.u32 %v388, 2147483648
        %v393 = vxor.u32 %v389, 2147483648
        %v394 = vxor.u32 %v390, 2147483648
        %v395 = vxor.u32 %v391, 2147483648
        %v396 = vmul.f32 %v392, 1.442695
        %v397 = vpow.pop %v396
        %v398 = vmul.f32 %v393, 1.442695
        %v399 = vpow.pop %v398
        %v400 = vmul.f32 %v394, 1.442695
        %v401 = vpow.pop %v400
        %v402 = vmul.f32 %v395, 1.442695
        %v403 = vpow.pop %v402
        %v404 = vadd.f32 %v397, 1.0
        %v405 = vadd.f32 %v399, 1.0
        %v406 = vadd.f32 %v401, 1.0
        %v407 = vadd.f32 %v403, 1.0
        %v408 = vrcp.pop %v404
        %v409 = vmul.f32 %v404, %v408
        %v410 = vsub.f32 1.0, %v409
        %v411 = vmul.f32 %v408, %v410
        %v412 = vadd.f32 %v408, %v411
        %vm413 = vweird.f32 %v404
        %vm414 = vweird.f32 %v408
        %vm415 = vmor %vm413, %vm414
        %v416 = vsel %vm415, %v408, %v412
        %v417 = vand.u32 2147483647, %v404
        %vm418 = vcmp.eq.f32.partialorder %v417, 8.507059e+37
        %v419 = vand.u32 %v404, 2147483648
        %v420 = vor.u32 1.1754944e-38, %v419
        %v421 = vsel %vm418, %v420, %v416
        %v422 = vmul.f32 1.0, %v421
        %v423 = vrcp.pop %v405
        %v424 = vmul.f32 %v405, %v423
        %v425 = vsub.f32 1.0, %v424
        %v426 = vmul.f32 %v423, %v425
        %v427 = vadd.f32 %v423, %v426
        %vm428 = vweird.f32 %v405
        %vm429 = vweird.f32 %v423
        %vm430 = vmor %vm428, %vm429
        %v431 = vsel %vm430, %v423, %v427
        %v432 = vand.u32 2147483647, %v405
        %vm433 = vcmp.eq.f32.partialorder %v432, 8.507059e+37
        %v434 = vand.u32 %v405, 2147483648
        %v435 = vor.u32 1.1754944e-38, %v434
        %v436 = vsel %vm433, %v435, %v431
        %v437 = vmul.f32 1.0, %v436
        %v438 = vrcp.pop %v406
        %v439 = vmul.f32 %v406, %v438
        %v440 = vsub.f32 1.0, %v439
        %v441 = vmul.f32 %v438, %v440
        %v442 = vadd.f32 %v438, %v441
        %vm443 = vweird.f32 %v406
        %vm444 = vweird.f32 %v438
        %vm445 = vmor %vm443, %vm444
        %v446 = vsel %vm445, %v438, %v442
        %v447 = vand.u32 2147483647, %v406
        %vm448 = vcmp.eq.f32.partialorder %v447, 8.507059e+37
        %v449 = vand.u32 %v406, 2147483648
        %v450 = vor.u32 1.1754944e-38, %v449
        %v451 = vsel %vm448, %v450, %v446
        %v452 = vmul.f32 1.0, %v451
        %v453 = vrcp.pop %v407
        %v454 = vmul.f32 %v407, %v453
        %v455 = vsub.f32 1.0, %v454
        %v456 = vmul.f32 %v453, %v455
        %v457 = vadd.f32 %v453, %v456
        %vm458 = vweird.f32 %v407
        %vm459 = vweird.f32 %v453
        %vm460 = vmor %vm458, %vm459
        %v461 = vsel %vm460, %v453, %v457
        %v462 = vand.u32 2147483647, %v407
        %vm463 = vcmp.eq.f32.partialorder %v462, 8.507059e+37
        %v464 = vand.u32 %v407, 2147483648
        %v465 = vor.u32 1.1754944e-38, %v464
        %v466 = vsel %vm463, %v465, %v461
        %v467 = vmul.f32 1.0, %v466
        %v468 = vld [vmem:[%s279] sm:$0xff]
        %v469 = vld [vmem:[%s279 + $0x8] sm:$0xff]
        %v470 = vld [vmem:[%s279 + $0x10] sm:$0xff]
        %v471 = vld [vmem:[%s279 + $0x18] sm:$0xff]
        %v472 = vld [vmem:[%s279 + $0x20] sm:$0xff]
        %v473 = vld [vmem:[%s279 + $0x28] sm:$0xff]
        %v474 = vld [vmem:[%s279 + $0x30] sm:$0xff]
        %v475 = vld [vmem:[%s279 + $0x38] sm:$0xff]
        %477 = vset.pattern.permute.xlu0 0
        %478 = vperm.xlu0 %477, %v422
        %v479 = vpop.permute.xlu0 %478
        %482 = vset.pattern.permute.xlu0 0
        %483 = vperm.xlu0 %482, %v437
        %v484 = vpop.permute.xlu0 %483
        %487 = vset.pattern.permute.xlu0 0
        %488 = vperm.xlu0 %487, %v452
        %v489 = vpop.permute.xlu0 %488
        %492 = vset.pattern.permute.xlu0 0
        %493 = vperm.xlu0 %492, %v467
        %v494 = vpop.permute.xlu0 %493
        %v496 = vmul.f32 %v314, %v479
        %v497 = vmul.f32 %v315, %v479
        %v498 = vmul.f32 %v316, %v484
        %v499 = vmul.f32 %v317, %v484
        %v500 = vmul.f32 %v318, %v489
        %v501 = vmul.f32 %v319, %v489
        %v502 = vmul.f32 %v320, %v494
        %v503 = vmul.f32 %v321, %v494
        %v504 = vadd.f32 %v468, %v496
        %v505 = vadd.f32 %v469, %v497
        %v506 = vadd.f32 %v470, %v498
        %v507 = vadd.f32 %v471, %v499
        %v508 = vadd.f32 %v472, %v500
        %v509 = vadd.f32 %v473, %v501
        %v510 = vadd.f32 %v474, %v502
        %v511 = vadd.f32 %v475, %v503
        %512 = vst [vmem:[%s313] sm:$0xff] %v504
        %513 = vst [vmem:[%s313 + $0x8] sm:$0xff] %v505
        %514 = vst [vmem:[%s313 + $0x10] sm:$0xff] %v506
        %515 = vst [vmem:[%s313 + $0x18] sm:$0xff] %v507
        %516 = vst [vmem:[%s313 + $0x20] sm:$0xff] %v508
        %517 = vst [vmem:[%s313 + $0x28] sm:$0xff] %v509
        %518 = vst [vmem:[%s313 + $0x30] sm:$0xff] %v510
        %519 = vst [vmem:[%s313 + $0x38] sm:$0xff] %v511
        %s520 = sand.u32 %s170, 1
        %s521 = scalar_lea.sflag [#allocation4], %s520
        %s522 = sand.u32 %s170, 1
        %s523 = smul.addr %s522, 64
        %s524 = scalar_lea.vmem [#allocation7], %s523
        // Predicated region
        $region53: #{tpu_custom_call.1} parent=43 // pred_check
          %p525 = pneg %p180
        $region54: #{tpu_custom_call.1} parent=43 // pred_check_branch
          %527 = sbr.rel (%p525) target = $region56
        $region55: #{tpu_custom_call.1} parent=43 // pred_region
          %529 = vsyncadd %s521, 0
          %s530 = smul.addr %s26, 8
          %s531 = smul.addr %s530, 8
          %s532 = scalar_lea.hbm %s6, %s531
          %s533 = sshll.u32 %s524, 4
          %s534 = int_to_ptr.vmem [resolvable:$true] %s533
          %s535 = sshll.u32 %s532, 4
          %s536 = int_to_ptr.hbm [resolvable:$true] %s535
          %541 = dma.vmem_to_hbm [thread:$0]  %s534, 1024, %s536, %s521, 256, 256, 16
        $region56: #{tpu_custom_call.1} parent=43 // pred_fallthru
          _
      $region44: #{tpu_custom_call.1} parent=5 // pred_fallthru
        _
      %p542 = scmp.le.s32.totalorder 2, %s21
      // Predicated region
      $region57: #{tpu_custom_call.1} parent=5 // pred_check
        %p543 = pneg %p542
      $region58: #{tpu_custom_call.1} parent=5 // pred_check_branch
        %545 = sbr.rel (%p543) target = $region60
      $region59: #{tpu_custom_call.1} parent=5 // pred_region
        %s546 = ssub.s32 %s21, 2
        // Predicated region
        $region61: #{tpu_custom_call.1} parent=59 // pred_check
          %p547 = pneg %p186
        $region62: #{tpu_custom_call.1} parent=59 // pred_check_branch
          %549 = sbr.rel (%p547) target = $region64
        $region63: #{tpu_custom_call.1} parent=59 // pred_region
          %s550 = sand.u32 %s171, 1
          %s551 = scalar_lea.sflag [#allocation4], %s550
          %s552 = sand.u32 %s171, 1
          %s553 = smul.addr %s552, 64
          %s554 = scalar_lea.vmem [#allocation7], %s553
          %556 = dma.done %s551, 1024
        $region64: #{tpu_custom_call.1} parent=59 // pred_fallthru
          _
      $region60: #{tpu_custom_call.1} parent=5 // pred_fallthru
        _
    $region6: #{tpu_custom_call.1} parent=1 // loop_footer
      %s25 = sadd.s32 1, %s21
    $region7: #{tpu_custom_call.1} parent=1 // loop_footer_branch
      %20 = sbr.rel target = $region3
    $region8: #{tpu_custom_call.1} parent=1 // loop_exit
      _
    %557 = vsyncpa [#allocation3], 1
    %s558 = scalar_lea.sflag [#allocation3], 1
    %559 = vsyncpa %s558, 1
    %560 = vsyncpa [#allocation6], 1
    %s561 = scalar_lea.sflag [#allocation6], 1
    %562 = vsyncpa %s561, 1
    %563 = vsyncpa [#allocation4], 1
    %s564 = scalar_lea.sflag [#allocation4], 1
    %565 = vsyncpa %s564, 1

</llo_original>
